<compile_context>
chip_gen: v6e
topology: v6e:2x2x1
jax: 0.10.0
libtpu: 0.0.40
codegen_flags: <defaults>
</compile_context>

<pallas_src>
import functools

import jax
import jax.numpy as jnp
import numpy as np
from jax.experimental import pallas as pl
from jax.experimental.pallas import tpu as pltpu


def _gaussian_ansatz_kernel(xs_ref, mus_ref, aug_ref, out_ref, *, d, basis_dtype):
    xs = xs_ref[...]          # (d, tk)    f32, pre-scaled by sqrt(0.5/sigma), K lane-dense
    mus = mus_ref[...]        # (m, d)     f32, pre-scaled, grid-resident
    aug = aug_ref[...]        # (d+1, m)   f32, theta/sigma/normalization baked in

    # neg_dist2[m, k] = -sum_i (mus[m, i] - xs[i, k])^2   -- pure VPU broadcasts,
    # static python loop over the (tiny) spatial dimension d; accumulated negatively
    # so exp() takes it directly with no extra multiply.
    neg_dist2 = None
    for i in range(d):
        diff = mus[:, i:i + 1] - xs[i:i + 1, :]            # (m, 1)-(1, tk) -> (m, tk)
        sq = diff * diff
        neg_dist2 = -sq if neg_dist2 is None else neg_dist2 - sq

    # Un-normalized gaussian basis; all constants live in `aug`.
    if basis_dtype == jnp.bfloat16:
        basis = jnp.exp(neg_dist2.astype(jnp.bfloat16))    # bf16 EUP (v6e/v7x)
        W = jnp.dot(aug.astype(jnp.bfloat16), basis,
                    preferred_element_type=jnp.float32)    # (d+1, tk), f32 accumulate
    else:
        basis = jnp.exp(neg_dist2)                         # (m, tk) f32
        W = jnp.dot(aug, basis, preferred_element_type=jnp.float32)

    s = W[d:d + 1, :]                                      # (1, tk)  == -sqrt(2/sigma)*S
    t = W[0:d, :]                                          # (d, tk)  == -T/sigma
    out_ref[...] = (xs * s - t).astype(out_ref.dtype)      # == -(1/sigma)*(x*S - T)


def _default_block_k(K, m):
    # Budget ~12 MiB for the live (m, block_k) f32 intermediates (diff/dist2/basis),
    # leaving plenty of headroom under a 32 MiB scoped VMEM limit (v5e/v6e/v7x safe).
    budget_bytes = 12 * 1024 * 1024
    bk = (budget_bytes // (3 * m * 4)) // 128 * 128
    bk = int(max(256, min(8192, bk)))
    if K <= 256:
        return max(128, 128 * pl.cdiv(K, 128))             # tiny problem: single block
    # Keep at least 2 blocks so the "parallel" K axis can shard across v7x's 2 TCs.
    return int(min(bk, 128 * pl.cdiv(pl.cdiv(K, 2), 128)))


def gaussian_ansatz_forward_lane_dense(xs_t, mus, aug, *, block_k, basis_dtype=jnp.float32):
    """Lane-dense entry: xs_t (d, K_pad) pre-scaled, mus (m, d) pre-scaled, aug (d+1, m)."""
    d, K_pad = xs_t.shape
    m = mus.shape[0]
    num_blocks = K_pad // block_k

    kernel = functools.partial(_gaussian_ansatz_kernel, d=int(d), basis_dtype=basis_dtype)

    return pl.pallas_call(
        kernel,
        out_shape=jax.ShapeDtypeStruct((d, K_pad), jnp.float32),
        grid_spec=pltpu.PrefetchScalarGridSpec(
            num_scalar_prefetch=0,
            grid=(num_blocks,),
            in_specs=[
                pl.BlockSpec((d, block_k), lambda i: (0, i)),   # xs tile (lane-dense)
                pl.BlockSpec((m, d), lambda i: (0, 0)),         # scaled means, grid-resident
                pl.BlockSpec((d + 1, m), lambda i: (0, 0)),     # theta-weighted aug
            ],
            out_specs=pl.BlockSpec((d, block_k), lambda i: (0, i)),
        ),
        compiler_params=pltpu.CompilerParams(
            dimension_semantics=("parallel",),
            vmem_limit_bytes=32 * 1024 * 1024),
    )(xs_t, mus, aug)


def gaussian_ansatz_forward(x, means, theta, sigma_i, normalized=True, *,
                            block_k=None, basis_dtype=jnp.float32):
    """x: (K, d) f32, means: (m, d) f32, theta: (m,) f32 -> (K, d) f32."""
    K, d = x.shape
    m = means.shape[0]

    x = x.astype(jnp.float32)
    means = means.astype(jnp.float32)
    theta = theta.astype(jnp.float32)

    # All sigma math in jnp so sigma may be a traced value (no per-sigma recompile).
    sigma = jnp.asarray(sigma_i, dtype=jnp.float32)
    c = jnp.sqrt(0.5 / sigma)                                   # sqrt(0.5/sigma)

    if normalized:
        theta_eff = theta * (2.0 * jnp.pi * sigma) ** (-d / 2.0)
    else:
        theta_eff = theta

    # Augmented, theta-weighted matrix (all scalar factors folded in here):
    #   rows 0..d-1: -theta_eff*means[:,i]/sigma      (yields  t = -T/sigma)
    #   row d      : -theta_eff*sqrt(2/sigma)         (yields  s = -sqrt(2/sigma)*S)
    # so that out = xs*s - t = -(1/sigma)*(x*S - T).
    row_t = -(theta_eff[None, :] * means.T) / sigma             # (d, m)
    row_s = -(theta_eff * jnp.sqrt(2.0 / sigma))[None, :]       # (1, m)
    aug = jnp.concatenate([row_t, row_s], axis=0)               # (d+1, m)

    mus = c * means                                             # (m, d) pre-scaled

    # Lane-dense layout: K on the last (lane) axis; pad K up to a multiple of block_k.
    if block_k is None:
        block_k = _default_block_k(K, m)
    num_blocks = pl.cdiv(K, block_k)
    K_pad = num_blocks * block_k

    xs_t = jnp.pad(c * x.T, ((0, 0), (0, K_pad - K)))           # (d, K_pad), pre-scaled

    out_t = gaussian_ansatz_forward_lane_dense(
        xs_t, mus, aug, block_k=block_k, basis_dtype=basis_dtype)

    return out_t[:, :K].T                                       # (K, d)


def _reference_forward(x, means, theta, sigma_i, normalized=True):
    # pure-JAX mirror of the PyTorch forward (for a sanity check)
    diff = x[:, None, :] - means[None, :, :]                    # (K, m, d)
    log_basis = -0.5 * jnp.sum(diff ** 2, axis=2) / sigma_i     # (K, m)
    if normalized:
        log_basis = log_basis - jnp.log(2.0 * jnp.pi * sigma_i) * x.shape[1] / 2.0
    basis = jnp.exp(log_basis)
    grad = -(diff / sigma_i) * basis[:, :, None]                # (K, m, d)
    return jnp.tensordot(grad, theta, axes=([1], [0]))          # (K, d)


if __name__ == "__main__":
    # Deterministic synthetic setup matching set_unif_dist_ansatz_functions:
    #   d = 2, m_i = 8 gaussians per axis -> m = 64, sigma_i = 0.5
    d = 2
    m_i = 8
    m = m_i ** d
    sigma_i = 0.5

    # uniform grid of means over domain [-3, 3]^d (np.mgrid semantics)
    axes = [np.linspace(-3.0, 3.0, m_i) for _ in range(d)]
    grid = np.meshgrid(*axes, indexing="ij")
    means_np = np.stack(grid, axis=-1).reshape(m, d).astype(np.float32)
    means = jnp.asarray(means_np)

    key = jax.random.PRNGKey(0)
    k_theta, k_x1, k_x2, k_x3 = jax.random.split(key, 4)
    theta = jax.random.normal(k_theta, (m,), dtype=jnp.float32)  # torch.randn(m) analog

    # Case 1: K not a multiple of 128 -> exercises the zero-padded tail path (1 block).
    K1 = 200
    x1 = jax.random.uniform(k_x1, (K1, d), dtype=jnp.float32, minval=-3.0, maxval=3.0)
    out1 = jax.block_until_ready(
        gaussian_ansatz_forward(x1, means, theta, sigma_i, normalized=True))
    ref1 = _reference_forward(x1, means, theta, sigma_i, normalized=True)
    np.testing.assert_allclose(np.asarray(out1), np.asarray(ref1), rtol=1e-5, atol=1e-5)

    # Case 2: explicit small block_k -> multi-tile pipelined grid (3 steps).
    K2 = 384
    x2 = jax.random.uniform(k_x2, (K2, d), dtype=jnp.float32, minval=-3.0, maxval=3.0)
    out2 = jax.block_until_ready(
        gaussian_ansatz_forward(x2, means, theta, sigma_i, normalized=True, block_k=128))
    ref2 = _reference_forward(x2, means, theta, sigma_i, normalized=True)
    np.testing.assert_allclose(np.asarray(out2), np.asarray(ref2), rtol=1e-5, atol=1e-5)

    # Case 3: larger K -> default VMEM-budgeted block_k (2048) with 2 parallel blocks.
    K3 = 4096
    x3 = jax.random.uniform(k_x3, (K3, d), dtype=jnp.float32, minval=-3.0, maxval=3.0)
    out3 = jax.block_until_ready(
        gaussian_ansatz_forward(x3, means, theta, sigma_i, normalized=True))
    ref3 = _reference_forward(x3, means, theta, sigma_i, normalized=True)
    np.testing.assert_allclose(np.asarray(out3), np.asarray(ref3), rtol=1e-5, atol=1e-5)

    print("KERNEL_OK")
</pallas_src>

<mosaic_0001>
module attributes {stable_mosaic.version = 11 : i64} {
  func.func @_gaussian_ansatz_kernel(%arg0: i32, %arg1: memref<2x256xf32, #tpu.memory_space<vmem>>, %arg2: memref<64x2xf32, #tpu.memory_space<vmem>>, %arg3: memref<3x64xf32, #tpu.memory_space<vmem>>, %arg4: memref<2x256xf32, #tpu.memory_space<vmem>>) attributes {dimension_semantics = [#tpu.dimension_semantics<parallel>], iteration_bounds = array<i64: 1>, scalar_prefetch = 0 : i64, scratch_operands = 0 : i64, tpu.core_type = #tpu.core_type<tc>, window_params = [{transform_indices = @transform_0, window_bounds = array<i64: 2, 256>}, {pipeline_mode = #tpu.pipeline_mode<synchronous>, transform_indices = @transform_1, window_bounds = array<i64: 64, 2>}, {pipeline_mode = #tpu.pipeline_mode<synchronous>, transform_indices = @transform_2, window_bounds = array<i64: 3, 64>}, {transform_indices = @transform_3, window_bounds = array<i64: 2, 256>}]} {
    %c0 = arith.constant 0 : index
    %c0_0 = arith.constant 0 : index
    %0 = vector.load %arg1[%c0, %c0_0] : memref<2x256xf32, #tpu.memory_space<vmem>>, vector<2x256xf32>
    %c0_1 = arith.constant 0 : index
    %c0_2 = arith.constant 0 : index
    %1 = vector.load %arg2[%c0_1, %c0_2] : memref<64x2xf32, #tpu.memory_space<vmem>>, vector<64x2xf32>
    %c0_3 = arith.constant 0 : index
    %c0_4 = arith.constant 0 : index
    %2 = vector.load %arg3[%c0_3, %c0_4] : memref<3x64xf32, #tpu.memory_space<vmem>>, vector<3x64xf32>
    %3 = vector.extract_strided_slice %1 {offsets = [0, 0], sizes = [64, 1], strides = [1, 1]} : vector<64x2xf32> to vector<64x1xf32>
    %4 = vector.extract_strided_slice %0 {offsets = [0, 0], sizes = [1, 256], strides = [1, 1]} : vector<2x256xf32> to vector<1x256xf32>
    %5 = vector.broadcast %3 : vector<64x1xf32> to vector<64x256xf32>
    %6 = vector.broadcast %4 : vector<1x256xf32> to vector<64x256xf32>
    %7 = arith.subf %5, %6 : vector<64x256xf32>
    %8 = arith.mulf %7, %7 : vector<64x256xf32>
    %cst = arith.constant 0.000000e+00 : f32
    %9 = vector.broadcast %cst : f32 to vector<64x256xf32>
    %10 = arith.subf %9, %8 : vector<64x256xf32>
    %11 = vector.extract_strided_slice %1 {offsets = [0, 1], sizes = [64, 1], strides = [1, 1]} : vector<64x2xf32> to vector<64x1xf32>
    %12 = vector.extract_strided_slice %0 {offsets = [1, 0], sizes = [1, 256], strides = [1, 1]} : vector<2x256xf32> to vector<1x256xf32>
    %13 = vector.broadcast %11 : vector<64x1xf32> to vector<64x256xf32>
    %14 = vector.broadcast %12 : vector<1x256xf32> to vector<64x256xf32>
    %15 = arith.subf %13, %14 : vector<64x256xf32>
    %16 = arith.mulf %15, %15 : vector<64x256xf32>
    %17 = arith.subf %10, %16 : vector<64x256xf32>
    %18 = math.exp %17 : vector<64x256xf32>
    %cst_5 = arith.constant dense<0.000000e+00> : vector<3x256xf32>
    %19 = tpu.matmul %2, %18, %cst_5 {dimension_numbers = #tpu.dot_dimension_numbers<[1], [0], [0], [1], [0, 0, 1, 1], [], []>} : vector<3x64xf32>, vector<64x256xf32>, vector<3x256xf32> -> vector<3x256xf32>
    %20 = vector.extract_strided_slice %19 {offsets = [2, 0], sizes = [1, 256], strides = [1, 1]} : vector<3x256xf32> to vector<1x256xf32>
    %21 = vector.extract_strided_slice %19 {offsets = [0, 0], sizes = [2, 256], strides = [1, 1]} : vector<3x256xf32> to vector<2x256xf32>
    %22 = vector.broadcast %20 : vector<1x256xf32> to vector<2x256xf32>
    %23 = arith.mulf %0, %22 : vector<2x256xf32>
    %24 = arith.subf %23, %21 : vector<2x256xf32>
    %c0_6 = arith.constant 0 : index
    %c0_7 = arith.constant 0 : index
    %25 = vector.load %arg4[%c0_6, %c0_7] : memref<2x256xf32, #tpu.memory_space<vmem>>, vector<2x256xf32>
    tpu.vector_store %arg4[%c0_6, %c0_7], %24 {strides = array<i32>} : memref<2x256xf32, #tpu.memory_space<vmem>>, vector<2x256xf32>,
    return
  }
  func.func @transform_0(%arg0: i32) -> (i32, i32) {
    %c0_i32 = arith.constant 0 : i32
    %c0_i32_0 = arith.constant 0 : i32
    return %c0_i32, %arg0 : i32, i32
  }
  func.func @transform_1(%arg0: i32) -> (i32, i32) {
    %c0_i32 = arith.constant 0 : i32
    %c0_i32_0 = arith.constant 0 : i32
    %c0_i32_1 = arith.constant 0 : i32
    return %c0_i32, %c0_i32_0 : i32, i32
  }
  func.func @transform_2(%arg0: i32) -> (i32, i32) {
    %c0_i32 = arith.constant 0 : i32
    %c0_i32_0 = arith.constant 0 : i32
    %c0_i32_1 = arith.constant 0 : i32
    return %c0_i32, %c0_i32_0 : i32, i32
  }
  func.func @transform_3(%arg0: i32) -> (i32, i32) {
    %c0_i32 = arith.constant 0 : i32
    %c0_i32_0 = arith.constant 0 : i32
    return %c0_i32, %arg0 : i32, i32
  }
}

</mosaic_0001>

<llo_original>
// kernel: tpu_custom_call.1
$region0: #{tpu_custom_call.1}
  #allocation0 [shape = 'u32[]', space=smem, size = 0x4, offset = 0x4, fixed_abs, tag = 'smem constant byte address 0x4 - core index']
  #allocation1 [shape = 'u32[144,128]{1,0:T(1,128)}', space=vmem, size = 0x12000, scoped, tag = 'internal scratch']
  %s0 = inlined_call_operand.vmem [shape: f32[2,256], index: 0, kind: input, shape index: {}]
  %s1 = inlined_call_operand.vmem [shape: f32[64,2], index: 1, kind: input, shape index: {}]
  %s2 = inlined_call_operand.vmem [shape: f32[3,64], index: 2, kind: input, shape index: {}]
  %s3 = inlined_call_operand.hbm [shape: f32[2,256], index: 3, kind: output, shape index: {}]
  %s4 = sld [smem:[#allocation0]]
  $region22: #{tpu_custom_call.1} parent=0
    _
  %s6 = ssub.s32 1, %s4
  %s7 = scalar_select 0, %s6, %s4
  $region1: #{tpu_custom_call.1} parent=0
    #allocation2 [shape = 'u8[2048]{0}', space=vmem, size = 0x800, scoped, tag = 'output window, operand 0, single buffered']
    #allocation3 [shape = 's32[1]{0}', space=sflag, size = 0x4, scoped, tag = 'scoped memory for tpu_custom_call.1']
    %8 = vsyncpa [#allocation3], 0
    // Predicated region
    $region2: #{tpu_custom_call.1} parent=1 // pred_check
      _
    $region3: #{tpu_custom_call.1} parent=1 // pred_check_branch
      %10 = sbr.rel (0) target = $region5
    $region4: #{tpu_custom_call.1} parent=1 // pred_region
      _
    $region5: #{tpu_custom_call.1} parent=1 // pred_fallthru
      _
    // Predicated region
    $region6: #{tpu_custom_call.1} parent=1 // pred_check
      _
    $region7: #{tpu_custom_call.1} parent=1 // pred_check_branch
      %12 = sbr.rel (0) target = $region9
    $region8: #{tpu_custom_call.1} parent=1 // pred_region
      _
    $region9: #{tpu_custom_call.1} parent=1 // pred_fallthru
      _
    // Predicated region
    $region10: #{tpu_custom_call.1} parent=1 // pred_check
      _
    $region11: #{tpu_custom_call.1} parent=1 // pred_check_branch
      %14 = sbr.rel (0) target = $region13
    $region12: #{tpu_custom_call.1} parent=1 // pred_region
      _
    $region13: #{tpu_custom_call.1} parent=1 // pred_fallthru
      _
    %v15 = vld [vmem:[%s0] sm:$0xf]
    %v16 = vld [vmem:[%s1] sm:$0xff]
    %v17 = vld [vmem:[%s1 + $0x8] sm:$0xff]
    %v18 = vld [vmem:[%s1 + $0x10] sm:$0xff]
    %v19 = vld [vmem:[%s1 + $0x18] sm:$0xff]
    %v20 = vld [vmem:[%s1 + $0x20] sm:$0xff]
    %v21 = vld [vmem:[%s1 + $0x28] sm:$0xff]
    %v22 = vld [vmem:[%s1 + $0x30] sm:$0xff]
    %v23 = vld [vmem:[%s1 + $0x38] sm:$0xff]
    %v24 = vld [vmem:[%s2] sm:$0x7]
    %26 = vset.pattern.permute.xlu0 0
    %27 = vperm.xlu0 %26, %v16
    %v28 = vpop.permute.xlu0 %27
    %31 = vset.pattern.permute.xlu0 0
    %32 = vperm.xlu0 %31, %v17
    %v33 = vpop.permute.xlu0 %32
    %36 = vset.pattern.permute.xlu0 0
    %37 = vperm.xlu0 %36, %v18
    %v38 = vpop.permute.xlu0 %37
    %41 = vset.pattern.permute.xlu0 0
    %42 = vperm.xlu0 %41, %v19
    %v43 = vpop.permute.xlu0 %42
    %46 = vset.pattern.permute.xlu0 0
    %47 = vperm.xlu0 %46, %v20
    %v48 = vpop.permute.xlu0 %47
    %51 = vset.pattern.permute.xlu0 0
    %52 = vperm.xlu0 %51, %v21
    %v53 = vpop.permute.xlu0 %52
    %56 = vset.pattern.permute.xlu0 0
    %57 = vperm.xlu0 %56, %v22
    %v58 = vpop.permute.xlu0 %57
    %61 = vset.pattern.permute.xlu0 0
    %62 = vperm.xlu0 %61, %v23
    %v63 = vpop.permute.xlu0 %62
    %v66 = vlaneseq
    %v67 = vshrl.u32 %v66, 7
    %v68 = vsub.s32 0, %v67
    %v69 = vrot.slane %v15, %v68
    %v70 = vlaneseq
    %v71 = vshrl.u32 %v70, 7
    %v72 = vsub.s32 2, %v71
    %v73 = vrot.slane %v15, %v72
    %v76 = vlaneseq
    %v77 = vshrl.u32 %v76, 7
    %v78 = vsub.s32 0, %v77
    %v79 = vrot.slane %v69, %v78
    %v80 = vlaneseq
    %v81 = vshrl.u32 %v80, 7
    %v82 = vsub.s32 0, %v81
    %v83 = vrot.slane %v73, %v82
    %v84 = vsub.f32 %v28, %v79
    %v85 = vsub.f32 %v28, %v83
    %v86 = vsub.f32 %v33, %v79
    %v87 = vsub.f32 %v33, %v83
    %v88 = vsub.f32 %v38, %v79
    %v89 = vsub.f32 %v38, %v83
    %v90 = vsub.f32 %v43, %v79
    %v91 = vsub.f32 %v43, %v83
    %v92 = vsub.f32 %v48, %v79
    %v93 = vsub.f32 %v48, %v83
    %v94 = vsub.f32 %v53, %v79
    %v95 = vsub.f32 %v53, %v83
    %v96 = vsub.f32 %v58, %v79
    %v97 = vsub.f32 %v58, %v83
    %v98 = vsub.f32 %v63, %v79
    %v99 = vsub.f32 %v63, %v83
    %v100 = vmul.f32 %v84, %v84
    %v101 = vmul.f32 %v85, %v85
    %v102 = vmul.f32 %v86, %v86
    %v103 = vmul.f32 %v87, %v87
    %v104 = vmul.f32 %v88, %v88
    %v105 = vmul.f32 %v89, %v89
    %v106 = vmul.f32 %v90, %v90
    %v107 = vmul.f32 %v91, %v91
    %v108 = vmul.f32 %v92, %v92
    %v109 = vmul.f32 %v93, %v93
    %v110 = vmul.f32 %v94, %v94
    %v111 = vmul.f32 %v95, %v95
    %v112 = vmul.f32 %v96, %v96
    %v113 = vmul.f32 %v97, %v97
    %v114 = vmul.f32 %v98, %v98
    %v115 = vmul.f32 %v99, %v99
    %v116 = vsub.f32 0.0, %v100
    %v117 = vsub.f32 0.0, %v101
    %v118 = vsub.f32 0.0, %v102
    %v119 = vsub.f32 0.0, %v103
    %v120 = vsub.f32 0.0, %v104
    %v121 = vsub.f32 0.0, %v105
    %v122 = vsub.f32 0.0, %v106
    %v123 = vsub.f32 0.0, %v107
    %v124 = vsub.f32 0.0, %v108
    %v125 = vsub.f32 0.0, %v109
    %v126 = vsub.f32 0.0, %v110
    %v127 = vsub.f32 0.0, %v111
    %v128 = vsub.f32 0.0, %v112
    %v129 = vsub.f32 0.0, %v113
    %v130 = vsub.f32 0.0, %v114
    %v131 = vsub.f32 0.0, %v115
    %132 = vset.pattern.permute.xlu0 1
    %133 = vperm.xlu0 %132, %v16
    %v134 = vpop.permute.xlu0 %133
    %136 = vset.pattern.permute.xlu0 1
    %137 = vperm.xlu0 %136, %v17
    %v138 = vpop.permute.xlu0 %137
    %140 = vset.pattern.permute.xlu0 1
    %141 = vperm.xlu0 %140, %v18
    %v142 = vpop.permute.xlu0 %141
    %144 = vset.pattern.permute.xlu0 1
    %145 = vperm.xlu0 %144, %v19
    %v146 = vpop.permute.xlu0 %145
    %148 = vset.pattern.permute.xlu0 1
    %149 = vperm.xlu0 %148, %v20
    %v150 = vpop.permute.xlu0 %149
    %152 = vset.pattern.permute.xlu0 1
    %153 = vperm.xlu0 %152, %v21
    %v154 = vpop.permute.xlu0 %153
    %156 = vset.pattern.permute.xlu0 1
    %157 = vperm.xlu0 %156, %v22
    %v158 = vpop.permute.xlu0 %157
    %160 = vset.pattern.permute.xlu0 1
    %161 = vperm.xlu0 %160, %v23
    %v162 = vpop.permute.xlu0 %161
    %v164 = vlaneseq
    %v165 = vshrl.u32 %v164, 7
    %v166 = vsub.s32 1, %v165
    %v167 = vrot.slane %v15, %v166
    %v168 = vlaneseq
    %v169 = vshrl.u32 %v168, 7
    %v170 = vsub.s32 3, %v169
    %v171 = vrot.slane %v15, %v170
    %v174 = vlaneseq
    %v175 = vshrl.u32 %v174, 7
    %v176 = vsub.s32 1, %v175
    %v177 = vrot.slane %v167, %v176
    %v178 = vlaneseq
    %v179 = vshrl.u32 %v178, 7
    %v180 = vsub.s32 1, %v179
    %v181 = vrot.slane %v171, %v180
    %v182 = vsub.f32 %v134, %v177
    %v183 = vsub.f32 %v134, %v181
    %v184 = vsub.f32 %v138, %v177
    %v185 = vsub.f32 %v138, %v181
    %v186 = vsub.f32 %v142, %v177
    %v187 = vsub.f32 %v142, %v181
    %v188 = vsub.f32 %v146, %v177
    %v189 = vsub.f32 %v146, %v181
    %v190 = vsub.f32 %v150, %v177
    %v191 = vsub.f32 %v150, %v181
    %v192 = vsub.f32 %v154, %v177
    %v193 = vsub.f32 %v154, %v181
    %v194 = vsub.f32 %v158, %v177
    %v195 = vsub.f32 %v158, %v181
    %v196 = vsub.f32 %v162, %v177
    %v197 = vsub.f32 %v162, %v181
    %v198 = vmul.f32 %v182, %v182
    %v199 = vmul.f32 %v183, %v183
    %v200 = vmul.f32 %v184, %v184
    %v201 = vmul.f32 %v185, %v185
    %v202 = vmul.f32 %v186, %v186
    %v203 = vmul.f32 %v187, %v187
    %v204 = vmul.f32 %v188, %v188
    %v205 = vmul.f32 %v189, %v189
    %v206 = vmul.f32 %v190, %v190
    %v207 = vmul.f32 %v191, %v191
    %v208 = vmul.f32 %v192, %v192
    %v209 = vmul.f32 %v193, %v193
    %v210 = vmul.f32 %v194, %v194
    %v211 = vmul.f32 %v195, %v195
    %v212 = vmul.f32 %v196, %v196
    %v213 = vmul.f32 %v197, %v197
    %v214 = vsub.f32 %v116, %v198
    %v215 = vsub.f32 %v117, %v199
    %v216 = vsub.f32 %v118, %v200
    %v217 = vsub.f32 %v119, %v201
    %v218 = vsub.f32 %v120, %v202
    %v219 = vsub.f32 %v121, %v203
    %v220 = vsub.f32 %v122, %v204
    %v221 = vsub.f32 %v123, %v205
    %v222 = vsub.f32 %v124, %v206
    %v223 = vsub.f32 %v125, %v207
    %v224 = vsub.f32 %v126, %v208
    %v225 = vsub.f32 %v127, %v209
    %v226 = vsub.f32 %v128, %v210
    %v227 = vsub.f32 %v129, %v211
    %v228 = vsub.f32 %v130, %v212
    %v229 = vsub.f32 %v131, %v213
    %v230 = vmul.f32 %v214, 1.442695
    %v231 = vpow.pop %v230
    %v232 = vmul.f32 %v215, 1.442695
    %v233 = vpow.pop %v232
    %v234 = vmul.f32 %v216, 1.442695
    %v235 = vpow.pop %v234
    %v236 = vmul.f32 %v217, 1.442695
    %v237 = vpow.pop %v236
    %v238 = vmul.f32 %v218, 1.442695
    %v239 = vpow.pop %v238
    %v240 = vmul.f32 %v219, 1.442695
    %v241 = vpow.pop %v240
    %v242 = vmul.f32 %v220, 1.442695
    %v243 = vpow.pop %v242
    %v244 = vmul.f32 %v221, 1.442695
    %v245 = vpow.pop %v244
    %v246 = vmul.f32 %v222, 1.442695
    %v247 = vpow.pop %v246
    %v248 = vmul.f32 %v223, 1.442695
    %v249 = vpow.pop %v248
    %v250 = vmul.f32 %v224, 1.442695
    %v251 = vpow.pop %v250
    %v252 = vmul.f32 %v225, 1.442695
    %v253 = vpow.pop %v252
    %v254 = vmul.f32 %v226, 1.442695
    %v255 = vpow.pop %v254
    %v256 = vmul.f32 %v227, 1.442695
    %v257 = vpow.pop %v256
    %v258 = vmul.f32 %v228, 1.442695
    %v259 = vpow.pop %v258
    %v260 = vmul.f32 %v229, 1.442695
    %v261 = vpow.pop %v260
    %vm262 = vcmask 523264
    %v264 = vsel %vm262, %v24, 0
    %266 = vmatprep.subr.mxu0 0.0
    %267 = vmatpush1.msra.mxu0 0.0
    %268 = vmatprep.subr.mxu0 0.0
    %269 = vmatpush1.msra.mxu0 0.0
    %270 = vmatprep.subr.mxu0 0.0
    %271 = vmatpush1.msra.mxu0 0.0
    %272 = vmatprep.subr.mxu0 0.0
    %273 = vmatpush1.msra.mxu0 0.0
    %274 = vmatprep.subr.mxu0 0.0
    %275 = vmatpush1.msra.mxu0 0.0
    %276 = vmatprep.subr.mxu0 0.0
    %277 = vmatpush1.msra.mxu0 0.0
    %278 = vmatprep.subr.mxu0 0.0
    %279 = vmatpush1.msra.mxu0 0.0
    %280 = vmatprep.subr.mxu0 0.0
    %281 = vmatpush1.msra.mxu0 0.0
    %282 = vmatprep.subr.mxu0 %v261
    %283 = vmatpush1.msra.mxu0 %v259
    %284 = vmatprep.subr.mxu0 %v257
    %285 = vmatpush1.msra.mxu0 %v255
    %286 = vmatprep.subr.mxu0 %v253
    %287 = vmatpush1.msra.mxu0 %v251
    %288 = vmatprep.subr.mxu0 %v249
    %289 = vmatpush1.msra.mxu0 %v247
    %290 = vmatprep.subr.mxu0 %v245
    %291 = vmatpush1.msra.mxu0 %v243
    %292 = vmatprep.subr.mxu0 %v241
    %293 = vmatpush1.msra.mxu0 %v239
    %294 = vmatprep.subr.mxu0 %v237
    %295 = vmatpush1.msra.mxu0 %v235
    %296 = vmatprep.subr.mxu0 %v233
    %297 = vmatpush1.msra.mxu0 %v231
    %298 = vmatprep.subr.mxu0 0.0
    %299 = vmatpush2.msra.mxu0 0.0
    %300 = vmatprep.subr.mxu0 0.0
    %301 = vmatpush2.msra.mxu0 0.0
    %302 = vmatprep.subr.mxu0 0.0
    %303 = vmatpush2.msra.mxu0 0.0
    %304 = vmatprep.subr.mxu0 0.0
    %305 = vmatpush2.msra.mxu0 0.0
    %306 = vmatprep.subr.mxu0 0.0
    %307 = vmatpush2.msra.mxu0 0.0
    %308 = vmatprep.subr.mxu0 0.0
    %309 = vmatpush2.msra.mxu0 0.0
    %310 = vmatprep.subr.mxu0 0.0
    %311 = vmatpush2.msra.mxu0 0.0
    %312 = vmatprep.subr.mxu0 0.0
    %313 = vmatpush2.msra.mxu0 0.0
    %314 = vmatprep.subr.mxu0 0.0
    %315 = vmatpush2.msra.mxu0 0.0
    %316 = vmatprep.subr.mxu0 0.0
    %317 = vmatpush2.msra.mxu0 0.0
    %318 = vmatprep.subr.mxu0 0.0
    %319 = vmatpush2.msra.mxu0 0.0
    %320 = vmatprep.subr.mxu0 0.0
    %321 = vmatpush2.msra.mxu0 0.0
    %322 = vmatprep.subr.mxu0 0.0
    %323 = vmatpush2.msra.mxu0 0.0
    %324 = vmatprep.subr.mxu0 0.0
    %325 = vmatpush2.msra.mxu0 0.0
    %326 = vmatprep.subr.mxu0 0.0
    %327 = vmatpush2.msra.mxu0 0.0
    %328 = vmatprep.subr.mxu0 0.0
    %329 = vmatpush2.msra.mxu0 0.0
    %330 = vmatprep.mubr.f32.mxu0 0.0
    %331 = vmatmul.mubr.f32.gmra.mxu0 %v264
    %v332 = vpop.f32.mrf.mxu0
    %v333 = vadd.f32 0.0, %v332
    %v334 = vpop.f32.mrf.mxu0
    %v335 = vadd.f32 0.0, %v334
    %336 = vdwg.mxu0
    %v337 = vlaneseq
    %v338 = vshrl.u32 %v337, 7
    %v339 = vsub.s32 2, %v338
    %v340 = vrot.slane %v333, %v339
    %v341 = vlaneseq
    %v342 = vshrl.u32 %v341, 7
    %v343 = vsub.s32 2, %v342
    %v344 = vrot.slane %v335, %v343
    %v347 = vcombine.low %v340, %v344
    %v349 = vunpack.c.l.s4 1983009808
    %v350 = vunpack.c.0.s8 %v349
    %v351 = vlaneseq
    %v352 = vshrl.u32 %v351, 7
    %v353 = vsub.s32 %v350, %v352
    %v354 = vrot.slane %v347, %v353
    %v356 = vmul.f32 %v15, %v354
    %v359 = vcombine.low %v333, %v335
    %v361 = vunpack.c.l.s4 1983009808
    %v362 = vunpack.c.0.s8 %v361
    %v363 = vlaneseq
    %v364 = vshrl.u32 %v363, 7
    %v365 = vsub.s32 %v362, %v364
    %v366 = vrot.slane %v359, %v365
    %v368 = vsub.f32 %v356, %v366
    %369 = vst [vmem:[#allocation2] sm:$0xf] %v368
    // Predicated region
    $region14: #{tpu_custom_call.1} parent=1 // pred_check
      _
    $region15: #{tpu_custom_call.1} parent=1 // pred_check_branch
      %371 = sbr.rel (0) target = $region17
    $region16: #{tpu_custom_call.1} parent=1 // pred_region
      %s373 = ssub.s32 64, 64
      %374 = vsyncadd [#allocation3], %s373
      %s376 = sshll.u32 [#allocation2], 4
      %s377 = int_to_ptr.vmem [resolvable:$true] %s376
      %379 = dma.vmem_to_hbm [thread:$0]  %s377, 64, %s3, [#allocation3]
    $region17: #{tpu_custom_call.1} parent=1 // pred_fallthru
      _
    // Predicated region
    $region18: #{tpu_custom_call.1} parent=1 // pred_check
      _
    $region19: #{tpu_custom_call.1} parent=1 // pred_check_branch
      %381 = sbr.rel (0) target = $region21
    $region20: #{tpu_custom_call.1} parent=1 // pred_region
      %382 = dma.done [#allocation3], 64
    $region21: #{tpu_custom_call.1} parent=1 // pred_fallthru
      _
    %383 = vsyncpa [#allocation3], 1

</llo_original>
